<compile_context>
chip_gen: v5e
topology: v5e:2x2
jax: 0.10.0
libtpu: 0.0.40
codegen_flags: <defaults>
</compile_context>

<pallas_src>
import jax
import jax.numpy as jnp
from jax.experimental import pallas as pl
from jax.experimental.pallas import tpu as pltpu


def _round_up(a, b):
    return (a + b - 1) // b * b


def _harmonic_kernel(x_ref, freq_ref, out_ref):
    # x_ref:    (TN, D)       tile of flattened input rows
    # freq_ref: (1, H)        harmonic frequencies (same block every step)
    # out_ref:  (TN, 2*D*H)   [ sin(x*f) | cos(x*f) ]
    x = x_ref[...]                       # (TN, D)
    freqs = freq_ref[...]                # (1, H)
    tn, d = x.shape
    h = freqs.shape[-1]
    dh = d * h
    # embed[n, d*H + h] = x[n, d] * freq[h]   (exact f32 elementwise multiply,
    # bit-matching the PyTorch/JAX reference even for huge high-harmonic args)
    embed = (x[:, :, None] * freqs[0][None, None, :]).reshape(tn, dh)
    # Write the two halves directly -- no concatenate temp.
    out_ref[:, :dh] = jnp.sin(embed)
    out_ref[:, dh:] = jnp.cos(embed)


def harmonic_embedding(x, n_harmonic_functions=60, omega0=0.1, row_tile=512):
    """Pallas TPU implementation of HarmonicEmbedding.forward.

    Args:
      x: array of shape [..., dim], float32.
    Returns:
      embedding of shape [..., n_harmonic_functions * dim * 2], float32.
    """
    x = jnp.asarray(x, jnp.float32)
    *lead, dim = x.shape
    n_rows = 1
    for s in lead:
        n_rows *= s
    x2d = x.reshape(n_rows, dim)

    # Deterministic "parameters" (registered buffer in the torch module).
    freqs = omega0 * (2.0 ** jnp.arange(n_harmonic_functions, dtype=jnp.float32))
    freqs = freqs.reshape(1, n_harmonic_functions)

    h = n_harmonic_functions
    out_width = 2 * dim * h

    # Row tile: big enough to amortize per-step overhead and issue large DMAs,
    # but never larger than the (8-rounded) row count so small inputs are a
    # single snug block.  512 keeps the per-step VMEM footprint (~3 MB with
    # double buffering + temps) well inside every generation's scoped limit.
    rt = max(8, min(int(row_tile), _round_up(n_rows, 8)))
    rt = _round_up(rt, 8)

    grid = (pl.cdiv(n_rows, rt),)  # ragged last block is masked by Pallas

    out2d = pl.pallas_call(
        _harmonic_kernel,
        out_shape=jax.ShapeDtypeStruct((n_rows, out_width), jnp.float32),
        grid_spec=pltpu.PrefetchScalarGridSpec(
            num_scalar_prefetch=0,
            grid=grid,
            in_specs=[
                pl.BlockSpec((rt, dim), lambda i: (i, 0)),
                pl.BlockSpec((1, h), lambda i: (0, 0)),
            ],
            out_specs=pl.BlockSpec((rt, out_width), lambda i: (i, 0)),
        ),
        compiler_params=pltpu.CompilerParams(
            dimension_semantics=("parallel",),
            vmem_limit_bytes=32 * 1024 * 1024,
        ),
    )(x2d, freqs)

    return out2d.reshape(*lead, out_width)


def _reference(x, n_harmonic_functions=60, omega0=0.1):
    freqs = omega0 * (2.0 ** jnp.arange(n_harmonic_functions, dtype=jnp.float32))
    embed = (x[..., None] * freqs).reshape(*x.shape[:-1], -1)
    return jnp.concatenate([jnp.sin(embed), jnp.cos(embed)], axis=-1)


if __name__ == "__main__":
    key = jax.random.PRNGKey(0)

    # Case 1: small [minibatch, seq, dim] with dim=3 (e.g. xyz coordinates).
    x = jax.random.normal(key, (2, 8, 3), dtype=jnp.float32)
    out = harmonic_embedding(x, n_harmonic_functions=60, omega0=0.1)
    out = jax.block_until_ready(out)
    ref = _reference(x, n_harmonic_functions=60, omega0=0.1)
    assert out.shape == (2, 8, 360), out.shape
    assert jnp.allclose(out, ref, atol=1e-5, rtol=1e-5), "mismatch vs reference"

    # Case 2: multi-block grid with a ragged last block (exercises the
    # no-pad / masked-writeback path): 150 rows, forced row_tile=64 -> 3 steps.
    k2 = jax.random.PRNGKey(0)
    x2 = jax.random.normal(k2, (3, 50, 3), dtype=jnp.float32)
    out2 = harmonic_embedding(x2, n_harmonic_functions=60, omega0=0.1, row_tile=64)
    out2 = jax.block_until_ready(out2)
    ref2 = _reference(x2, n_harmonic_functions=60, omega0=0.1)
    assert out2.shape == (3, 50, 360), out2.shape
    assert jnp.allclose(out2, ref2, atol=1e-5, rtol=1e-5), "mismatch vs reference (ragged)"

    print("KERNEL_OK")
</pallas_src>

<mosaic_0001>
module attributes {stable_mosaic.version = 11 : i64} {
  func.func @_harmonic_kernel(%arg0: i32, %arg1: memref<16x3xf32, #tpu.memory_space<vmem>>, %arg2: memref<1x60xf32, #tpu.memory_space<vmem>>, %arg3: memref<16x360xf32, #tpu.memory_space<vmem>>) attributes {dimension_semantics = [#tpu.dimension_semantics<parallel>], iteration_bounds = array<i64: 1>, scalar_prefetch = 0 : i64, scratch_operands = 0 : i64, tpu.core_type = #tpu.core_type<tc>, window_params = [{transform_indices = @transform_0, window_bounds = array<i64: 16, 3>}, {pipeline_mode = #tpu.pipeline_mode<synchronous>, transform_indices = @transform_1, window_bounds = array<i64: 1, 60>}, {transform_indices = @transform_2, window_bounds = array<i64: 16, 360>}]} {
    %c0 = arith.constant 0 : index
    %c0_0 = arith.constant 0 : index
    %0 = vector.load %arg1[%c0, %c0_0] : memref<16x3xf32, #tpu.memory_space<vmem>>, vector<16x3xf32>
    %c0_1 = arith.constant 0 : index
    %c0_2 = arith.constant 0 : index
    %1 = vector.load %arg2[%c0_1, %c0_2] : memref<1x60xf32, #tpu.memory_space<vmem>>, vector<1x60xf32>
    %2 = vector.shape_cast %0 : vector<16x3xf32> to vector<16x3x1xf32>
    %3 = vector.shape_cast %1 : vector<1x60xf32> to vector<60xf32>
    %4 = vector.shape_cast %3 : vector<60xf32> to vector<1x1x60xf32>
    %5 = vector.broadcast %2 : vector<16x3x1xf32> to vector<16x3x60xf32>
    %6 = vector.broadcast %4 : vector<1x1x60xf32> to vector<16x3x60xf32>
    %7 = arith.mulf %5, %6 : vector<16x3x60xf32>
    %8 = vector.shape_cast %7 : vector<16x3x60xf32> to vector<16x180xf32>
    %9 = math.sin %8 : vector<16x180xf32>
    %c0_3 = arith.constant 0 : index
    %c0_4 = arith.constant 0 : index
    %10 = vector.load %arg3[%c0_3, %c0_4] : memref<16x360xf32, #tpu.memory_space<vmem>>, vector<16x180xf32>
    tpu.vector_store %arg3[%c0_3, %c0_4], %9 {strides = array<i32>} : memref<16x360xf32, #tpu.memory_space<vmem>>, vector<16x180xf32>,
    %11 = math.cos %8 : vector<16x180xf32>
    %c0_5 = arith.constant 0 : index
    %c180 = arith.constant 180 : index
    %12 = vector.load %arg3[%c0_5, %c180] : memref<16x360xf32, #tpu.memory_space<vmem>>, vector<16x180xf32>
    tpu.vector_store %arg3[%c0_5, %c180], %11 {strides = array<i32>} : memref<16x360xf32, #tpu.memory_space<vmem>>, vector<16x180xf32>,
    return
  }
  func.func @transform_0(%arg0: i32) -> (i32, i32) {
    %c0_i32 = arith.constant 0 : i32
    %c0_i32_0 = arith.constant 0 : i32
    return %arg0, %c0_i32 : i32, i32
  }
  func.func @transform_1(%arg0: i32) -> (i32, i32) {
    %c0_i32 = arith.constant 0 : i32
    %c0_i32_0 = arith.constant 0 : i32
    %c0_i32_1 = arith.constant 0 : i32
    return %c0_i32, %c0_i32_0 : i32, i32
  }
  func.func @transform_2(%arg0: i32) -> (i32, i32) {
    %c0_i32 = arith.constant 0 : i32
    %c0_i32_0 = arith.constant 0 : i32
    return %arg0, %c0_i32 : i32, i32
  }
}

</mosaic_0001>

<llo_original>
// kernel: tpu_custom_call.1
$region0: #{tpu_custom_call.1}
  #allocation0 [shape = 'u32[]', space=smem, size = 0x4, offset = 0x4, fixed_abs, tag = 'smem constant byte address 0x4 - core index']
  #allocation1 [shape = 'u32[72,128]{1,0:T(1,128)}', space=vmem, size = 0x9000, scoped, tag = 'internal scratch']
  %s0 = inlined_call_operand.vmem [shape: f32[16,3], index: 0, kind: input, shape index: {}]
  %s1 = inlined_call_operand.vmem [shape: f32[1,60], index: 1, kind: input, shape index: {}]
  %s2 = inlined_call_operand.hbm [shape: f32[16,360], index: 2, kind: output, shape index: {}]
  %s3 = sld [smem:[#allocation0]]
  $region18: #{tpu_custom_call.1} parent=0
    _
  %s5 = ssub.s32 1, %s3
  %s6 = scalar_select 0, %s5, %s3
  $region1: #{tpu_custom_call.1} parent=0
    #allocation2 [shape = 'u8[24576]{0}', space=vmem, size = 0x6000, scoped, tag = 'output window, operand 0, single buffered']
    #allocation3 [shape = 's32[1]{0}', space=sflag, size = 0x4, scoped, tag = 'scoped memory for tpu_custom_call.1']
    %7 = vsyncpa [#allocation3], 0
    // Predicated region
    $region2: #{tpu_custom_call.1} parent=1 // pred_check
      _
    $region3: #{tpu_custom_call.1} parent=1 // pred_check_branch
      %9 = sbr.rel (0) target = $region5
    $region4: #{tpu_custom_call.1} parent=1 // pred_region
      _
    $region5: #{tpu_custom_call.1} parent=1 // pred_fallthru
      _
    // Predicated region
    $region6: #{tpu_custom_call.1} parent=1 // pred_check
      _
    $region7: #{tpu_custom_call.1} parent=1 // pred_check_branch
      %11 = sbr.rel (0) target = $region9
    $region8: #{tpu_custom_call.1} parent=1 // pred_region
      _
    $region9: #{tpu_custom_call.1} parent=1 // pred_fallthru
      _
    %v12 = vld [vmem:[%s0] sm:$0xff]
    %v13 = vld [vmem:[%s0 + $0x8] sm:$0xff]
    %v14 = vld [vmem:[%s1] sm:$0x1]
    %v15 = vperm.slane %v12, 0
    %v16 = vlaneseq
    %v17 = vshrl.u32 %v16, 7
    %19 = vset.pattern.permute.xlu0 %v17
    %20 = vperm.xlu0 %19, %v15
    %v21 = vpop.permute.xlu0 %20
    %v22 = vperm.slane %v12, 1
    %v23 = vlaneseq
    %v24 = vshrl.u32 %v23, 7
    %26 = vset.pattern.permute.xlu0 %v24
    %27 = vperm.xlu0 %26, %v22
    %v28 = vpop.permute.xlu0 %27
    %v29 = vperm.slane %v12, 2
    %v30 = vlaneseq
    %v31 = vshrl.u32 %v30, 7
    %33 = vset.pattern.permute.xlu0 %v31
    %34 = vperm.xlu0 %33, %v29
    %v35 = vpop.permute.xlu0 %34
    %v36 = vperm.slane %v12, 3
    %v37 = vlaneseq
    %v38 = vshrl.u32 %v37, 7
    %40 = vset.pattern.permute.xlu0 %v38
    %41 = vperm.xlu0 %40, %v36
    %v42 = vpop.permute.xlu0 %41
    %v43 = vperm.slane %v12, 4
    %v44 = vlaneseq
    %v45 = vshrl.u32 %v44, 7
    %47 = vset.pattern.permute.xlu0 %v45
    %48 = vperm.xlu0 %47, %v43
    %v49 = vpop.permute.xlu0 %48
    %v50 = vperm.slane %v12, 5
    %v51 = vlaneseq
    %v52 = vshrl.u32 %v51, 7
    %54 = vset.pattern.permute.xlu0 %v52
    %55 = vperm.xlu0 %54, %v50
    %v56 = vpop.permute.xlu0 %55
    %v57 = vperm.slane %v12, 6
    %v58 = vlaneseq
    %v59 = vshrl.u32 %v58, 7
    %61 = vset.pattern.permute.xlu0 %v59
    %62 = vperm.xlu0 %61, %v57
    %v63 = vpop.permute.xlu0 %62
    %v64 = vperm.slane %v12, 7
    %v65 = vlaneseq
    %v66 = vshrl.u32 %v65, 7
    %68 = vset.pattern.permute.xlu0 %v66
    %69 = vperm.xlu0 %68, %v64
    %v70 = vpop.permute.xlu0 %69
    %v71 = vperm.slane %v13, 0
    %v72 = vlaneseq
    %v73 = vshrl.u32 %v72, 7
    %75 = vset.pattern.permute.xlu0 %v73
    %76 = vperm.xlu0 %75, %v71
    %v77 = vpop.permute.xlu0 %76
    %v78 = vperm.slane %v13, 1
    %v79 = vlaneseq
    %v80 = vshrl.u32 %v79, 7
    %82 = vset.pattern.permute.xlu0 %v80
    %83 = vperm.xlu0 %82, %v78
    %v84 = vpop.permute.xlu0 %83
    %v85 = vperm.slane %v13, 2
    %v86 = vlaneseq
    %v87 = vshrl.u32 %v86, 7
    %89 = vset.pattern.permute.xlu0 %v87
    %90 = vperm.xlu0 %89, %v85
    %v91 = vpop.permute.xlu0 %90
    %v92 = vperm.slane %v13, 3
    %v93 = vlaneseq
    %v94 = vshrl.u32 %v93, 7
    %96 = vset.pattern.permute.xlu0 %v94
    %97 = vperm.xlu0 %96, %v92
    %v98 = vpop.permute.xlu0 %97
    %v99 = vperm.slane %v13, 4
    %v100 = vlaneseq
    %v101 = vshrl.u32 %v100, 7
    %103 = vset.pattern.permute.xlu0 %v101
    %104 = vperm.xlu0 %103, %v99
    %v105 = vpop.permute.xlu0 %104
    %v106 = vperm.slane %v13, 5
    %v107 = vlaneseq
    %v108 = vshrl.u32 %v107, 7
    %110 = vset.pattern.permute.xlu0 %v108
    %111 = vperm.xlu0 %110, %v106
    %v112 = vpop.permute.xlu0 %111
    %v113 = vperm.slane %v13, 6
    %v114 = vlaneseq
    %v115 = vshrl.u32 %v114, 7
    %117 = vset.pattern.permute.xlu0 %v115
    %118 = vperm.xlu0 %117, %v113
    %v119 = vpop.permute.xlu0 %118
    %v120 = vperm.slane %v13, 7
    %v121 = vlaneseq
    %v122 = vshrl.u32 %v121, 7
    %124 = vset.pattern.permute.xlu0 %v122
    %125 = vperm.xlu0 %124, %v120
    %v126 = vpop.permute.xlu0 %125
    %v128 = vperm.slane %v14, 0
    %v130 = vmul.f32 %v21, %v128
    %v131 = vmul.f32 %v28, %v128
    %v132 = vmul.f32 %v35, %v128
    %v133 = vmul.f32 %v42, %v128
    %v134 = vmul.f32 %v49, %v128
    %v135 = vmul.f32 %v56, %v128
    %v136 = vmul.f32 %v63, %v128
    %v137 = vmul.f32 %v70, %v128
    %v138 = vmul.f32 %v77, %v128
    %v139 = vmul.f32 %v84, %v128
    %v140 = vmul.f32 %v91, %v128
    %v141 = vmul.f32 %v98, %v128
    %v142 = vmul.f32 %v105, %v128
    %v143 = vmul.f32 %v112, %v128
    %v144 = vmul.f32 %v119, %v128
    %v145 = vmul.f32 %v126, %v128
    %v146 = vrot.slane %v132, 4
    %vm147 = vcmask 1047556
    %v148 = vsel %vm147, %v146, %v130
    %v150 = vunpack.c.l.s4 1983009808
    %v151 = vunpack.c.0.s8 %v150
    %v152 = vperm.slane %v148, %v151
    %v153 = vrot.slane %v133, 4
    %v154 = vsel %vm147, %v153, %v131
    %v156 = vunpack.c.l.s4 1983009808
    %v157 = vunpack.c.0.s8 %v156
    %v158 = vperm.slane %v154, %v157
    %v159 = vrot.slane %v136, 4
    %v160 = vsel %vm147, %v159, %v134
    %v162 = vunpack.c.l.s4 1983009808
    %v163 = vunpack.c.0.s8 %v162
    %v164 = vperm.slane %v160, %v163
    %v165 = vrot.slane %v137, 4
    %v166 = vsel %vm147, %v165, %v135
    %v168 = vunpack.c.l.s4 1983009808
    %v169 = vunpack.c.0.s8 %v168
    %v170 = vperm.slane %v166, %v169
    %v171 = vrot.slane %v158, 4
    %v172 = vsel %vm147, %v171, %v152
    %v173 = vrot.slane %v152, 4
    %v174 = vsel %vm147, %v158, %v173
    %v176 = vunpack.c.l.s4 1934713408
    %v177 = vunpack.c.0.s8 %v176
    %v178 = vperm.slane %v172, %v177
    %v180 = vunpack.c.l.s4 1934713408
    %v181 = vunpack.c.0.s8 %v180
    %v182 = vperm.slane %v174, %v181
    %v183 = vrot.slane %v170, 4
    %v184 = vsel %vm147, %v183, %v164
    %v185 = vrot.slane %v164, 4
    %v186 = vsel %vm147, %v170, %v185
    %v188 = vunpack.c.l.s4 1934713408
    %v189 = vunpack.c.0.s8 %v188
    %v190 = vperm.slane %v184, %v189
    %v192 = vunpack.c.l.s4 1934713408
    %v193 = vunpack.c.0.s8 %v192
    %v194 = vperm.slane %v186, %v193
    %v195 = vrot.slane %v190, 4
    %v196 = vsel %vm147, %v195, %v178
    %v197 = vrot.slane %v178, 4
    %v198 = vsel %vm147, %v190, %v197
    %v199 = vrot.slane %v194, 4
    %v200 = vsel %vm147, %v199, %v182
    %v201 = vrot.slane %v140, 4
    %v202 = vsel %vm147, %v201, %v138
    %v204 = vunpack.c.l.s4 1983009808
    %v205 = vunpack.c.0.s8 %v204
    %v206 = vperm.slane %v202, %v205
    %v207 = vrot.slane %v141, 4
    %v208 = vsel %vm147, %v207, %v139
    %v210 = vunpack.c.l.s4 1983009808
    %v211 = vunpack.c.0.s8 %v210
    %v212 = vperm.slane %v208, %v211
    %v213 = vrot.slane %v144, 4
    %v214 = vsel %vm147, %v213, %v142
    %v216 = vunpack.c.l.s4 1983009808
    %v217 = vunpack.c.0.s8 %v216
    %v218 = vperm.slane %v214, %v217
    %v219 = vrot.slane %v145, 4
    %v220 = vsel %vm147, %v219, %v143
    %v222 = vunpack.c.l.s4 1983009808
    %v223 = vunpack.c.0.s8 %v222
    %v224 = vperm.slane %v220, %v223
    %v225 = vrot.slane %v212, 4
    %v226 = vsel %vm147, %v225, %v206
    %v227 = vrot.slane %v206, 4
    %v228 = vsel %vm147, %v212, %v227
    %v230 = vunpack.c.l.s4 1934713408
    %v231 = vunpack.c.0.s8 %v230
    %v232 = vperm.slane %v226, %v231
    %v234 = vunpack.c.l.s4 1934713408
    %v235 = vunpack.c.0.s8 %v234
    %v236 = vperm.slane %v228, %v235
    %v237 = vrot.slane %v224, 4
    %v238 = vsel %vm147, %v237, %v218
    %v239 = vrot.slane %v218, 4
    %v240 = vsel %vm147, %v224, %v239
    %v242 = vunpack.c.l.s4 1934713408
    %v243 = vunpack.c.0.s8 %v242
    %v244 = vperm.slane %v238, %v243
    %v246 = vunpack.c.l.s4 1934713408
    %v247 = vunpack.c.0.s8 %v246
    %v248 = vperm.slane %v240, %v247
    %v249 = vrot.slane %v244, 4
    %v250 = vsel %vm147, %v249, %v232
    %v251 = vrot.slane %v232, 4
    %v252 = vsel %vm147, %v244, %v251
    %v253 = vrot.slane %v248, 4
    %v254 = vsel %vm147, %v253, %v236
    %257 = vrot.lane.b32.xlu0 %v198, 60
    %v258 = vpop.permute.xlu0 %257
    %259 = vrot.lane.b32.xlu0 %v252, 60
    %v260 = vpop.permute.xlu0 %259
    %265 = vrot.lane.b32.xlu0 %v200, 120
    %v266 = vpop.permute.xlu0 %265
    %267 = vrot.lane.b32.xlu0 %v254, 120
    %v268 = vpop.permute.xlu0 %267
    %vm271 = vcmask 490496
    %v272 = vsel %vm271, %v196, %v258
    %v273 = vsel %vm271, %v250, %v260
    %vm274 = vcmask 982016
    %v275 = vsel %vm274, %v272, %v266
    %v276 = vsel %vm274, %v273, %v268
    %v277 = vand.u32 2147483647, %v275
    %vm278 = vcmp.le.f32.partialorder %v277, 0.7853982
    %vm279 = vcmp.lt.s32.totalorder %v275, 0
    %v280 = vand.u32 %v275, 2139095040
    %v281 = vshrl.u32 %v280, 23
    %v282 = vsub.s32 %v281, 127
    %v283 = vand.u32 2147483647, %v275
    %v284 = vand.u32 %v283, 8388607
    %v285 = vor.u32 %v284, 8388608
    %v286 = vsub.s32 0, %v285
    %v287 = vadd.s32 %v282, 1
    %vm288 = vcmp.gt.s32.totalorder %v287, 0
    %v289 = vsel %vm288, %v287, 0
    %v290 = vshrl.u32 %v289, 5
    %v291 = vand.u32 %v289, 31
    %v292 = vsub.s32 32, %v291
    %v293 = vshrl.u32 683565275, %v292
    %v294 = vshll.u32 683565275, %v291
    %v295 = vshrl.u32 2475754826, %v292
    %v296 = vor.u32 %v294, %v295
    %v297 = vshll.u32 2475754826, %v291
    %v298 = vshrl.u32 2131351028, %v292
    %v299 = vor.u32 %v297, %v298
    %v300 = vshll.u32 2131351028, %v291
    %v301 = vshrl.u32 2102212464, %v292
    %v302 = vor.u32 %v300, %v301
    %v303 = vshll.u32 2102212464, %v291
    %v304 = vshrl.u32 920167782, %v292
    %v305 = vor.u32 %v303, %v304
    %v306 = vshll.u32 920167782, %v291
    %v307 = vshrl.u32 1326507024, %v292
    %v308 = vor.u32 %v306, %v307
    %vm309 = vcmp.lt.s32.totalorder %v290, 1
    %vm310 = vcmp.lt.s32.totalorder %v290, 2
    %vm311 = vcmp.lt.s32.totalorder %v290, 3
    %vm312 = vcmp.lt.s32.totalorder %v290, 4
    %v313 = vsel %vm309, %v293, %v296
    %v314 = vsel %vm312, %v302, 2102212464
    %v315 = vsel %vm311, %v299, %v314
    %v316 = vsel %vm310, %v313, %v315
    %v317 = vsel %vm309, %v296, %v299
    %v318 = vsel %vm312, %v305, 920167782
    %v319 = vsel %vm311, %v302, %v318
    %v320 = vsel %vm310, %v317, %v319
    %v321 = vsel %vm309, %v299, %v302
    %v322 = vsel %vm312, %v308, 1326507024
    %v323 = vsel %vm311, %v305, %v322
    %v324 = vsel %vm310, %v321, %v323
    %v325 = vshll.u32 %v285, 8
    %v326 = vand.u32 %v325, 65535
    %v327 = vshrl.u32 %v325, 16
    %v328 = vand.u32 %v324, 65535
    %v329 = vshrl.u32 %v324, 16
    %v330 = vmul.u32 %v326, %v328
    %v331 = vmul.u32 %v326, %v329
    %v332 = vmul.u32 %v327, %v328
    %v333 = vmul.u32 %v327, %v329
    %v334 = vshll.u32 %v331, 16
    %v335 = vshrl.u32 %v331, 16
    %v336 = vshll.u32 %v332, 16
    %v337 = vshrl.u32 %v332, 16
    %vm338 = vc.u32 %v330, %v334
    %v339 = vsel %vm338, 1, 0
    %v340 = vadd.s32 %v330, %v334
    %v341 = vadd.s32 %v333, %v339
    %vm342 = vc.u32 %v340, %v336
    %v343 = vsel %vm342, 1, 0
    %v344 = vadd.s32 %v340, %v336
    %v345 = vadd.s32 %v341, %v343
    %v346 = vadd.s32 %v345, %v335
    %v347 = vadd.s32 %v346, %v337
    %v348 = vand.u32 %v325, 65535
    %v349 = vshrl.u32 %v325, 16
    %v350 = vand.u32 %v320, 65535
    %v351 = vshrl.u32 %v320, 16
    %v352 = vmul.u32 %v348, %v350
    %v353 = vmul.u32 %v348, %v351
    %v354 = vmul.u32 %v349, %v350
    %v355 = vmul.u32 %v349, %v351
    %v356 = vshll.u32 %v353, 16
    %v357 = vshrl.u32 %v353, 16
    %v358 = vshll.u32 %v354, 16
    %v359 = vshrl.u32 %v354, 16
    %vm360 = vc.u32 %v352, %v356
    %v361 = vsel %vm360, 1, 0
    %v362 = vadd.s32 %v352, %v356
    %v363 = vadd.s32 %v355, %v361
    %vm364 = vc.u32 %v362, %v358
    %v365 = vsel %vm364, 1, 0
    %v366 = vadd.s32 %v362, %v358
    %v367 = vadd.s32 %v363, %v365
    %v368 = vadd.s32 %v367, %v357
    %v369 = vadd.s32 %v368, %v359
    %v370 = vmul.u32 %v325, %v316
    %v371 = vadd.s32 %v347, %v366
    %vm372 = vc.u32 %v347, %v366
    %v373 = vadd.s32 %v369, 1
    %v374 = vsel %vm372, %v373, %v369
    %v375 = vadd.s32 %v370, %v374
    %v376 = vadd.s32 %v375, 536870912
    %v377 = vshrl.u32 %v376, 30
    %v378 = vshll.u32 %v377, 30
    %v379 = vsub.s32 %v375, %v378
    %vm380 = vcmp.lt.s32.totalorder %v379, 0
    %v381 = vsub.s32 0, %v379
    %v382 = vsel %vm380, %v381, %v379
    %v383 = vclz %v382
    %v384 = vsub.s32 %v383, 2
    %vm385 = vcmp.gt.s32.totalorder 0, %v384
    %v386 = vsel %vm385, 0, %v384
    %v387 = vsub.s32 32, %v386
    %v388 = vshll.u32 %v379, %v386
    %v389 = vshrl.u32 %v371, %v387
    %v390 = vor.u32 %v388, %v389
    %v391 = vsub.s32 4294967266, %v386
    %v392 = vadd.s32 %v391, 127
    %v393 = vshll.u32 %v392, 23
    %v394 = vor.u32 4788187, %v393
    %v395 = vand.u32 2147483647, %v394
    %v397 = vcvt.s32.f32 %v390
    %v398 = vmul.f32 %v397, %v395
    %v399 = vxor.u32 %v398, 2147483648
    %v400 = vsel %vm279, %v399, %v398
    %v401 = vsub.s32 4, %v377
    %v402 = vsel %vm279, %v401, %v377
    %v403 = vsel %vm278, %v275, %v400
    %v404 = vsel %vm278, 0, %v402
    %v405 = vmul.f32 %v403, %v403
    %v406 = vmul.f32 %v405, -0.001358992
    %v407 = vadd.f32 %v406, 0.041655596
    %v408 = vmul.f32 %v405, %v407
    %v409 = vadd.f32 %v408, -0.4999988
    %v410 = vmul.f32 %v405, %v409
    %v411 = vadd.f32 1.0, %v410
    %v412 = vmul.f32 %v403, %v403
    %v413 = vmul.f32 %v412, -0.00019511016
    %v414 = vadd.f32 %v413, 0.008332121
    %v415 = vmul.f32 %v412, %v414
    %v416 = vadd.f32 %v415, -0.16666654
    %v417 = vmul.f32 %v412, %v416
    %v418 = vadd.f32 %v417, 1.0
    %v419 = vmul.f32 %v418, %v403
    %vm420 = vweird.f32 %v275
    %v421 = vadd.s32 %v404, 3
    %v422 = vand.u32 %v421, 3
    %vm423 = vcmp.lt.s32.totalorder %v422, 2
    %vm424 = vcmp.eq.s32.totalorder %v422, 0
    %v425 = vxor.u32 %v419, 2147483648
    %v426 = vsel %vm424, %v411, %v425
    %vm427 = vcmp.eq.s32.totalorder %v422, 2
    %v428 = vxor.u32 %v411, 2147483648
    %v429 = vsel %vm427, %v428, %v419
    %v430 = vsel %vm423, %v426, %v429
    %v431 = vsel %vm420, nan, %v430
    %v432 = vand.u32 2147483647, %v266
    %vm433 = vcmp.le.f32.partialorder %v432, 0.7853982
    %vm434 = vcmp.lt.s32.totalorder %v266, 0
    %v435 = vand.u32 %v266, 2139095040
    %v436 = vshrl.u32 %v435, 23
    %v437 = vsub.s32 %v436, 127
    %v438 = vand.u32 2147483647, %v266
    %v439 = vand.u32 %v438, 8388607
    %v440 = vor.u32 %v439, 8388608
    %v441 = vsub.s32 0, %v440
    %v442 = vadd.s32 %v437, 1
    %vm443 = vcmp.gt.s32.totalorder %v442, 0
    %v444 = vsel %vm443, %v442, 0
    %v445 = vshrl.u32 %v444, 5
    %v446 = vand.u32 %v444, 31
    %v447 = vsub.s32 32, %v446
    %v448 = vshrl.u32 683565275, %v447
    %v449 = vshll.u32 683565275, %v446
    %v450 = vshrl.u32 2475754826, %v447
    %v451 = vor.u32 %v449, %v450
    %v452 = vshll.u32 2475754826, %v446
    %v453 = vshrl.u32 2131351028, %v447
    %v454 = vor.u32 %v452, %v453
    %v455 = vshll.u32 2131351028, %v446
    %v456 = vshrl.u32 2102212464, %v447
    %v457 = vor.u32 %v455, %v456
    %v458 = vshll.u32 2102212464, %v446
    %v459 = vshrl.u32 920167782, %v447
    %v460 = vor.u32 %v458, %v459
    %v461 = vshll.u32 920167782, %v446
    %v462 = vshrl.u32 1326507024, %v447
    %v463 = vor.u32 %v461, %v462
    %vm464 = vcmp.lt.s32.totalorder %v445, 1
    %vm465 = vcmp.lt.s32.totalorder %v445, 2
    %vm466 = vcmp.lt.s32.totalorder %v445, 3
    %vm467 = vcmp.lt.s32.totalorder %v445, 4
    %v468 = vsel %vm464, %v448, %v451
    %v469 = vsel %vm467, %v457, 2102212464
    %v470 = vsel %vm466, %v454, %v469
    %v471 = vsel %vm465, %v468, %v470
    %v472 = vsel %vm464, %v451, %v454
    %v473 = vsel %vm467, %v460, 920167782
    %v474 = vsel %vm466, %v457, %v473
    %v475 = vsel %vm465, %v472, %v474
    %v476 = vsel %vm464, %v454, %v457
    %v477 = vsel %vm467, %v463, 1326507024
    %v478 = vsel %vm466, %v460, %v477
    %v479 = vsel %vm465, %v476, %v478
    %v480 = vshll.u32 %v440, 8
    %v481 = vand.u32 %v480, 65535
    %v482 = vshrl.u32 %v480, 16
    %v483 = vand.u32 %v479, 65535
    %v484 = vshrl.u32 %v479, 16
    %v485 = vmul.u32 %v481, %v483
    %v486 = vmul.u32 %v481, %v484
    %v487 = vmul.u32 %v482, %v483
    %v488 = vmul.u32 %v482, %v484
    %v489 = vshll.u32 %v486, 16
    %v490 = vshrl.u32 %v486, 16
    %v491 = vshll.u32 %v487, 16
    %v492 = vshrl.u32 %v487, 16
    %vm493 = vc.u32 %v485, %v489
    %v494 = vsel %vm493, 1, 0
    %v495 = vadd.s32 %v485, %v489
    %v496 = vadd.s32 %v488, %v494
    %vm497 = vc.u32 %v495, %v491
    %v498 = vsel %vm497, 1, 0
    %v499 = vadd.s32 %v495, %v491
    %v500 = vadd.s32 %v496, %v498
    %v501 = vadd.s32 %v500, %v490
    %v502 = vadd.s32 %v501, %v492
    %v503 = vand.u32 %v480, 65535
    %v504 = vshrl.u32 %v480, 16
    %v505 = vand.u32 %v475, 65535
    %v506 = vshrl.u32 %v475, 16
    %v507 = vmul.u32 %v503, %v505
    %v508 = vmul.u32 %v503, %v506
    %v509 = vmul.u32 %v504, %v505
    %v510 = vmul.u32 %v504, %v506
    %v511 = vshll.u32 %v508, 16
    %v512 = vshrl.u32 %v508, 16
    %v513 = vshll.u32 %v509, 16
    %v514 = vshrl.u32 %v509, 16
    %vm515 = vc.u32 %v507, %v511
    %v516 = vsel %vm515, 1, 0
    %v517 = vadd.s32 %v507, %v511
    %v518 = vadd.s32 %v510, %v516
    %vm519 = vc.u32 %v517, %v513
    %v520 = vsel %vm519, 1, 0
    %v521 = vadd.s32 %v517, %v513
    %v522 = vadd.s32 %v518, %v520
    %v523 = vadd.s32 %v522, %v512
    %v524 = vadd.s32 %v523, %v514
    %v525 = vmul.u32 %v480, %v471
    %v526 = vadd.s32 %v502, %v521
    %vm527 = vc.u32 %v502, %v521
    %v528 = vadd.s32 %v524, 1
    %v529 = vsel %vm527, %v528, %v524
    %v530 = vadd.s32 %v525, %v529
    %v531 = vadd.s32 %v530, 536870912
    %v532 = vshrl.u32 %v531, 30
    %v533 = vshll.u32 %v532, 30
    %v534 = vsub.s32 %v530, %v533
    %vm535 = vcmp.lt.s32.totalorder %v534, 0
    %v536 = vsub.s32 0, %v534
    %v537 = vsel %vm535, %v536, %v534
    %v538 = vclz %v537
    %v539 = vsub.s32 %v538, 2
    %vm540 = vcmp.gt.s32.totalorder 0, %v539
    %v541 = vsel %vm540, 0, %v539
    %v542 = vsub.s32 32, %v541
    %v543 = vshll.u32 %v534, %v541
    %v544 = vshrl.u32 %v526, %v542
    %v545 = vor.u32 %v543, %v544
    %v546 = vsub.s32 4294967266, %v541
    %v547 = vadd.s32 %v546, 127
    %v548 = vshll.u32 %v547, 23
    %v549 = vor.u32 4788187, %v548
    %v550 = vand.u32 2147483647, %v549
    %v552 = vcvt.s32.f32 %v545
    %v553 = vmul.f32 %v552, %v550
    %v554 = vxor.u32 %v553, 2147483648
    %v555 = vsel %vm434, %v554, %v553
    %v556 = vsub.s32 4, %v532
    %v557 = vsel %vm434, %v556, %v532
    %v558 = vsel %vm433, %v266, %v555
    %v559 = vsel %vm433, 0, %v557
    %v560 = vmul.f32 %v558, %v558
    %v561 = vmul.f32 %v560, -0.001358992
    %v562 = vadd.f32 %v561, 0.041655596
    %v563 = vmul.f32 %v560, %v562
    %v564 = vadd.f32 %v563, -0.4999988
    %v565 = vmul.f32 %v560, %v564
    %v566 = vadd.f32 1.0, %v565
    %v567 = vmul.f32 %v558, %v558
    %v568 = vmul.f32 %v567, -0.00019511016
    %v569 = vadd.f32 %v568, 0.008332121
    %v570 = vmul.f32 %v567, %v569
    %v571 = vadd.f32 %v570, -0.16666654
    %v572 = vmul.f32 %v567, %v571
    %v573 = vadd.f32 %v572, 1.0
    %v574 = vmul.f32 %v573, %v558
    %vm575 = vweird.f32 %v266
    %v576 = vadd.s32 %v559, 3
    %v577 = vand.u32 %v576, 3
    %vm578 = vcmp.lt.s32.totalorder %v577, 2
    %vm579 = vcmp.eq.s32.totalorder %v577, 0
    %v580 = vxor.u32 %v574, 2147483648
    %v581 = vsel %vm579, %v566, %v580
    %vm582 = vcmp.eq.s32.totalorder %v577, 2
    %v583 = vxor.u32 %v566, 2147483648
    %v584 = vsel %vm582, %v583, %v574
    %v585 = vsel %vm578, %v581, %v584
    %v586 = vsel %vm575, nan, %v585
    %v587 = vand.u32 2147483647, %v276
    %vm588 = vcmp.le.f32.partialorder %v587, 0.7853982
    %vm589 = vcmp.lt.s32.totalorder %v276, 0
    %v590 = vand.u32 %v276, 2139095040
    %v591 = vshrl.u32 %v590, 23
    %v592 = vsub.s32 %v591, 127
    %v593 = vand.u32 2147483647, %v276
    %v594 = vand.u32 %v593, 8388607
    %v595 = vor.u32 %v594, 8388608
    %v596 = vsub.s32 0, %v595
    %v597 = vadd.s32 %v592, 1
    %vm598 = vcmp.gt.s32.totalorder %v597, 0
    %v599 = vsel %vm598, %v597, 0
    %v600 = vshrl.u32 %v599, 5
    %v601 = vand.u32 %v599, 31
    %v602 = vsub.s32 32, %v601
    %v603 = vshrl.u32 683565275, %v602
    %v604 = vshll.u32 683565275, %v601
    %v605 = vshrl.u32 2475754826, %v602
    %v606 = vor.u32 %v604, %v605
    %v607 = vshll.u32 2475754826, %v601
    %v608 = vshrl.u32 2131351028, %v602
    %v609 = vor.u32 %v607, %v608
    %v610 = vshll.u32 2131351028, %v601
    %v611 = vshrl.u32 2102212464, %v602
    %v612 = vor.u32 %v610, %v611
    %v613 = vshll.u32 2102212464, %v601
    %v614 = vshrl.u32 920167782, %v602
    %v615 = vor.u32 %v613, %v614
    %v616 = vshll.u32 920167782, %v601
    %v617 = vshrl.u32 1326507024, %v602
    %v618 = vor.u32 %v616, %v617
    %vm619 = vcmp.lt.s32.totalorder %v600, 1
    %vm620 = vcmp.lt.s32.totalorder %v600, 2
    %vm621 = vcmp.lt.s32.totalorder %v600, 3
    %vm622 = vcmp.lt.s32.totalorder %v600, 4
    %v623 = vsel %vm619, %v603, %v606
    %v624 = vsel %vm622, %v612, 2102212464
    %v625 = vsel %vm621, %v609, %v624
    %v626 = vsel %vm620, %v623, %v625
    %v627 = vsel %vm619, %v606, %v609
    %v628 = vsel %vm622, %v615, 920167782
    %v629 = vsel %vm621, %v612, %v628
    %v630 = vsel %vm620, %v627, %v629
    %v631 = vsel %vm619, %v609, %v612
    %v632 = vsel %vm622, %v618, 1326507024
    %v633 = vsel %vm621, %v615, %v632
    %v634 = vsel %vm620, %v631, %v633
    %v635 = vshll.u32 %v595, 8
    %v636 = vand.u32 %v635, 65535
    %v637 = vshrl.u32 %v635, 16
    %v638 = vand.u32 %v634, 65535
    %v639 = vshrl.u32 %v634, 16
    %v640 = vmul.u32 %v636, %v638
    %v641 = vmul.u32 %v636, %v639
    %v642 = vmul.u32 %v637, %v638
    %v643 = vmul.u32 %v637, %v639
    %v644 = vshll.u32 %v641, 16
    %v645 = vshrl.u32 %v641, 16
    %v646 = vshll.u32 %v642, 16
    %v647 = vshrl.u32 %v642, 16
    %vm648 = vc.u32 %v640, %v644
    %v649 = vsel %vm648, 1, 0
    %v650 = vadd.s32 %v640, %v644
    %v651 = vadd.s32 %v643, %v649
    %vm652 = vc.u32 %v650, %v646
    %v653 = vsel %vm652, 1, 0
    %v654 = vadd.s32 %v650, %v646
    %v655 = vadd.s32 %v651, %v653
    %v656 = vadd.s32 %v655, %v645
    %v657 = vadd.s32 %v656, %v647
    %v658 = vand.u32 %v635, 65535
    %v659 = vshrl.u32 %v635, 16
    %v660 = vand.u32 %v630, 65535
    %v661 = vshrl.u32 %v630, 16
    %v662 = vmul.u32 %v658, %v660
    %v663 = vmul.u32 %v658, %v661
    %v664 = vmul.u32 %v659, %v660
    %v665 = vmul.u32 %v659, %v661
    %v666 = vshll.u32 %v663, 16
    %v667 = vshrl.u32 %v663, 16
    %v668 = vshll.u32 %v664, 16
    %v669 = vshrl.u32 %v664, 16
    %vm670 = vc.u32 %v662, %v666
    %v671 = vsel %vm670, 1, 0
    %v672 = vadd.s32 %v662, %v666
    %v673 = vadd.s32 %v665, %v671
    %vm674 = vc.u32 %v672, %v668
    %v675 = vsel %vm674, 1, 0
    %v676 = vadd.s32 %v672, %v668
    %v677 = vadd.s32 %v673, %v675
    %v678 = vadd.s32 %v677, %v667
    %v679 = vadd.s32 %v678, %v669
    %v680 = vmul.u32 %v635, %v626
    %v681 = vadd.s32 %v657, %v676
    %vm682 = vc.u32 %v657, %v676
    %v683 = vadd.s32 %v679, 1
    %v684 = vsel %vm682, %v683, %v679
    %v685 = vadd.s32 %v680, %v684
    %v686 = vadd.s32 %v685, 536870912
    %v687 = vshrl.u32 %v686, 30
    %v688 = vshll.u32 %v687, 30
    %v689 = vsub.s32 %v685, %v688
    %vm690 = vcmp.lt.s32.totalorder %v689, 0
    %v691 = vsub.s32 0, %v689
    %v692 = vsel %vm690, %v691, %v689
    %v693 = vclz %v692
    %v694 = vsub.s32 %v693, 2
    %vm695 = vcmp.gt.s32.totalorder 0, %v694
    %v696 = vsel %vm695, 0, %v694
    %v697 = vsub.s32 32, %v696
    %v698 = vshll.u32 %v689, %v696
    %v699 = vshrl.u32 %v681, %v697
    %v700 = vor.u32 %v698, %v699
    %v701 = vsub.s32 4294967266, %v696
    %v702 = vadd.s32 %v701, 127
    %v703 = vshll.u32 %v702, 23
    %v704 = vor.u32 4788187, %v703
    %v705 = vand.u32 2147483647, %v704
    %v707 = vcvt.s32.f32 %v700
    %v708 = vmul.f32 %v707, %v705
    %v709 = vxor.u32 %v708, 2147483648
    %v710 = vsel %vm589, %v709, %v708
    %v711 = vsub.s32 4, %v687
    %v712 = vsel %vm589, %v711, %v687
    %v713 = vsel %vm588, %v276, %v710
    %v714 = vsel %vm588, 0, %v712
    %v715 = vmul.f32 %v713, %v713
    %v716 = vmul.f32 %v715, -0.001358992
    %v717 = vadd.f32 %v716, 0.041655596
    %v718 = vmul.f32 %v715, %v717
    %v719 = vadd.f32 %v718, -0.4999988
    %v720 = vmul.f32 %v715, %v719
    %v721 = vadd.f32 1.0, %v720
    %v722 = vmul.f32 %v713, %v713
    %v723 = vmul.f32 %v722, -0.00019511016
    %v724 = vadd.f32 %v723, 0.008332121
    %v725 = vmul.f32 %v722, %v724
    %v726 = vadd.f32 %v725, -0.16666654
    %v727 = vmul.f32 %v722, %v726
    %v728 = vadd.f32 %v727, 1.0
    %v729 = vmul.f32 %v728, %v713
    %vm730 = vweird.f32 %v276
    %v731 = vadd.s32 %v714, 3
    %v732 = vand.u32 %v731, 3
    %vm733 = vcmp.lt.s32.totalorder %v732, 2
    %vm734 = vcmp.eq.s32.totalorder %v732, 0
    %v735 = vxor.u32 %v729, 2147483648
    %v736 = vsel %vm734, %v721, %v735
    %vm737 = vcmp.eq.s32.totalorder %v732, 2
    %v738 = vxor.u32 %v721, 2147483648
    %v739 = vsel %vm737, %v738, %v729
    %v740 = vsel %vm733, %v736, %v739
    %v741 = vsel %vm730, nan, %v740
    %v742 = vand.u32 2147483647, %v268
    %vm743 = vcmp.le.f32.partialorder %v742, 0.7853982
    %vm744 = vcmp.lt.s32.totalorder %v268, 0
    %v745 = vand.u32 %v268, 2139095040
    %v746 = vshrl.u32 %v745, 23
    %v747 = vsub.s32 %v746, 127
    %v748 = vand.u32 2147483647, %v268
    %v749 = vand.u32 %v748, 8388607
    %v750 = vor.u32 %v749, 8388608
    %v751 = vsub.s32 0, %v750
    %v752 = vadd.s32 %v747, 1
    %vm753 = vcmp.gt.s32.totalorder %v752, 0
    %v754 = vsel %vm753, %v752, 0
    %v755 = vshrl.u32 %v754, 5
    %v756 = vand.u32 %v754, 31
    %v757 = vsub.s32 32, %v756
    %v758 = vshrl.u32 683565275, %v757
    %v759 = vshll.u32 683565275, %v756
    %v760 = vshrl.u32 2475754826, %v757
    %v761 = vor.u32 %v759, %v760
    %v762 = vshll.u32 2475754826, %v756
    %v763 = vshrl.u32 2131351028, %v757
    %v764 = vor.u32 %v762, %v763
    %v765 = vshll.u32 2131351028, %v756
    %v766 = vshrl.u32 2102212464, %v757
    %v767 = vor.u32 %v765, %v766
    %v768 = vshll.u32 2102212464, %v756
    %v769 = vshrl.u32 920167782, %v757
    %v770 = vor.u32 %v768, %v769
    %v771 = vshll.u32 920167782, %v756
    %v772 = vshrl.u32 1326507024, %v757
    %v773 = vor.u32 %v771, %v772
    %vm774 = vcmp.lt.s32.totalorder %v755, 1
    %vm775 = vcmp.lt.s32.totalorder %v755, 2
    %vm776 = vcmp.lt.s32.totalorder %v755, 3
    %vm777 = vcmp.lt.s32.totalorder %v755, 4
    %v778 = vsel %vm774, %v758, %v761
    %v779 = vsel %vm777, %v767, 2102212464
    %v780 = vsel %vm776, %v764, %v779
    %v781 = vsel %vm775, %v778, %v780
    %v782 = vsel %vm774, %v761, %v764
    %v783 = vsel %vm777, %v770, 920167782
    %v784 = vsel %vm776, %v767, %v783
    %v785 = vsel %vm775, %v782, %v784
    %v786 = vsel %vm774, %v764, %v767
    %v787 = vsel %vm777, %v773, 1326507024
    %v788 = vsel %vm776, %v770, %v787
    %v789 = vsel %vm775, %v786, %v788
    %v790 = vshll.u32 %v750, 8
    %v791 = vand.u32 %v790, 65535
    %v792 = vshrl.u32 %v790, 16
    %v793 = vand.u32 %v789, 65535
    %v794 = vshrl.u32 %v789, 16
    %v795 = vmul.u32 %v791, %v793
    %v796 = vmul.u32 %v791, %v794
    %v797 = vmul.u32 %v792, %v793
    %v798 = vmul.u32 %v792, %v794
    %v799 = vshll.u32 %v796, 16
    %v800 = vshrl.u32 %v796, 16
    %v801 = vshll.u32 %v797, 16
    %v802 = vshrl.u32 %v797, 16
    %vm803 = vc.u32 %v795, %v799
    %v804 = vsel %vm803, 1, 0
    %v805 = vadd.s32 %v795, %v799
    %v806 = vadd.s32 %v798, %v804
    %vm807 = vc.u32 %v805, %v801
    %v808 = vsel %vm807, 1, 0
    %v809 = vadd.s32 %v805, %v801
    %v810 = vadd.s32 %v806, %v808
    %v811 = vadd.s32 %v810, %v800
    %v812 = vadd.s32 %v811, %v802
    %v813 = vand.u32 %v790, 65535
    %v814 = vshrl.u32 %v790, 16
    %v815 = vand.u32 %v785, 65535
    %v816 = vshrl.u32 %v785, 16
    %v817 = vmul.u32 %v813, %v815
    %v818 = vmul.u32 %v813, %v816
    %v819 = vmul.u32 %v814, %v815
    %v820 = vmul.u32 %v814, %v816
    %v821 = vshll.u32 %v818, 16
    %v822 = vshrl.u32 %v818, 16
    %v823 = vshll.u32 %v819, 16
    %v824 = vshrl.u32 %v819, 16
    %vm825 = vc.u32 %v817, %v821
    %v826 = vsel %vm825, 1, 0
    %v827 = vadd.s32 %v817, %v821
    %v828 = vadd.s32 %v820, %v826
    %vm829 = vc.u32 %v827, %v823
    %v830 = vsel %vm829, 1, 0
    %v831 = vadd.s32 %v827, %v823
    %v832 = vadd.s32 %v828, %v830
    %v833 = vadd.s32 %v832, %v822
    %v834 = vadd.s32 %v833, %v824
    %v835 = vmul.u32 %v790, %v781
    %v836 = vadd.s32 %v812, %v831
    %vm837 = vc.u32 %v812, %v831
    %v838 = vadd.s32 %v834, 1
    %v839 = vsel %vm837, %v838, %v834
    %v840 = vadd.s32 %v835, %v839
    %v841 = vadd.s32 %v840, 536870912
    %v842 = vshrl.u32 %v841, 30
    %v843 = vshll.u32 %v842, 30
    %v844 = vsub.s32 %v840, %v843
    %vm845 = vcmp.lt.s32.totalorder %v844, 0
    %v846 = vsub.s32 0, %v844
    %v847 = vsel %vm845, %v846, %v844
    %v848 = vclz %v847
    %v849 = vsub.s32 %v848, 2
    %vm850 = vcmp.gt.s32.totalorder 0, %v849
    %v851 = vsel %vm850, 0, %v849
    %v852 = vsub.s32 32, %v851
    %v853 = vshll.u32 %v844, %v851
    %v854 = vshrl.u32 %v836, %v852
    %v855 = vor.u32 %v853, %v854
    %v856 = vsub.s32 4294967266, %v851
    %v857 = vadd.s32 %v856, 127
    %v858 = vshll.u32 %v857, 23
    %v859 = vor.u32 4788187, %v858
    %v860 = vand.u32 2147483647, %v859
    %v862 = vcvt.s32.f32 %v855
    %v863 = vmul.f32 %v862, %v860
    %v864 = vxor.u32 %v863, 2147483648
    %v865 = vsel %vm744, %v864, %v863
    %v866 = vsub.s32 4, %v842
    %v867 = vsel %vm744, %v866, %v842
    %v868 = vsel %vm743, %v268, %v865
    %v869 = vsel %vm743, 0, %v867
    %v870 = vmul.f32 %v868, %v868
    %v871 = vmul.f32 %v870, -0.001358992
    %v872 = vadd.f32 %v871, 0.041655596
    %v873 = vmul.f32 %v870, %v872
    %v874 = vadd.f32 %v873, -0.4999988
    %v875 = vmul.f32 %v870, %v874
    %v876 = vadd.f32 1.0, %v875
    %v877 = vmul.f32 %v868, %v868
    %v878 = vmul.f32 %v877, -0.00019511016
    %v879 = vadd.f32 %v878, 0.008332121
    %v880 = vmul.f32 %v877, %v879
    %v881 = vadd.f32 %v880, -0.16666654
    %v882 = vmul.f32 %v877, %v881
    %v883 = vadd.f32 %v882, 1.0
    %v884 = vmul.f32 %v883, %v868
    %vm885 = vweird.f32 %v268
    %v886 = vadd.s32 %v869, 3
    %v887 = vand.u32 %v886, 3
    %vm888 = vcmp.lt.s32.totalorder %v887, 2
    %vm889 = vcmp.eq.s32.totalorder %v887, 0
    %v890 = vxor.u32 %v884, 2147483648
    %v891 = vsel %vm889, %v876, %v890
    %vm892 = vcmp.eq.s32.totalorder %v887, 2
    %v893 = vxor.u32 %v876, 2147483648
    %v894 = vsel %vm892, %v893, %v884
    %v895 = vsel %vm888, %v891, %v894
    %v896 = vsel %vm885, nan, %v895
    %897 = vst [vmem:[#allocation2] sm:$0xff] %v431
    %vm898 = vcmask 424960
    %899 = vst.msk [vmem:[#allocation2 + $0x8] sm:$0xff] %vm898, %v586
    %900 = vst [vmem:[#allocation2 + $0x18] sm:$0xff] %v741
    %901 = vst.msk [vmem:[#allocation2 + $0x20] sm:$0xff] %vm898, %v896
    %v902 = vand.u32 2147483647, %v275
    %vm903 = vcmp.le.f32.partialorder %v902, 0.7853982
    %vm904 = vcmp.lt.s32.totalorder %v275, 0
    %v905 = vand.u32 %v275, 2139095040
    %v906 = vshrl.u32 %v905, 23
    %v907 = vsub.s32 %v906, 127
    %v908 = vand.u32 2147483647, %v275
    %v909 = vand.u32 %v908, 8388607
    %v910 = vor.u32 %v909, 8388608
    %v911 = vsub.s32 0, %v910
    %v912 = vadd.s32 %v907, 1
    %vm913 = vcmp.gt.s32.totalorder %v912, 0
    %v914 = vsel %vm913, %v912, 0
    %v915 = vshrl.u32 %v914, 5
    %v916 = vand.u32 %v914, 31
    %v917 = vsub.s32 32, %v916
    %v918 = vshrl.u32 683565275, %v917
    %v919 = vshll.u32 683565275, %v916
    %v920 = vshrl.u32 2475754826, %v917
    %v921 = vor.u32 %v919, %v920
    %v922 = vshll.u32 2475754826, %v916
    %v923 = vshrl.u32 2131351028, %v917
    %v924 = vor.u32 %v922, %v923
    %v925 = vshll.u32 2131351028, %v916
    %v926 = vshrl.u32 2102212464, %v917
    %v927 = vor.u32 %v925, %v926
    %v928 = vshll.u32 2102212464, %v916
    %v929 = vshrl.u32 920167782, %v917
    %v930 = vor.u32 %v928, %v929
    %v931 = vshll.u32 920167782, %v916
    %v932 = vshrl.u32 1326507024, %v917
    %v933 = vor.u32 %v931, %v932
    %vm934 = vcmp.lt.s32.totalorder %v915, 1
    %vm935 = vcmp.lt.s32.totalorder %v915, 2
    %vm936 = vcmp.lt.s32.totalorder %v915, 3
    %vm937 = vcmp.lt.s32.totalorder %v915, 4
    %v938 = vsel %vm934, %v918, %v921
    %v939 = vsel %vm937, %v927, 2102212464
    %v940 = vsel %vm936, %v924, %v939
    %v941 = vsel %vm935, %v938, %v940
    %v942 = vsel %vm934, %v921, %v924
    %v943 = vsel %vm937, %v930, 920167782
    %v944 = vsel %vm936, %v927, %v943
    %v945 = vsel %vm935, %v942, %v944
    %v946 = vsel %vm934, %v924, %v927
    %v947 = vsel %vm937, %v933, 1326507024
    %v948 = vsel %vm936, %v930, %v947
    %v949 = vsel %vm935, %v946, %v948
    %v950 = vshll.u32 %v910, 8
    %v951 = vand.u32 %v950, 65535
    %v952 = vshrl.u32 %v950, 16
    %v953 = vand.u32 %v949, 65535
    %v954 = vshrl.u32 %v949, 16
    %v955 = vmul.u32 %v951, %v953
    %v956 = vmul.u32 %v951, %v954
    %v957 = vmul.u32 %v952, %v953
    %v958 = vmul.u32 %v952, %v954
    %v959 = vshll.u32 %v956, 16
    %v960 = vshrl.u32 %v956, 16
    %v961 = vshll.u32 %v957, 16
    %v962 = vshrl.u32 %v957, 16
    %vm963 = vc.u32 %v955, %v959
    %v964 = vsel %vm963, 1, 0
    %v965 = vadd.s32 %v955, %v959
    %v966 = vadd.s32 %v958, %v964
    %vm967 = vc.u32 %v965, %v961
    %v968 = vsel %vm967, 1, 0
    %v969 = vadd.s32 %v965, %v961
    %v970 = vadd.s32 %v966, %v968
    %v971 = vadd.s32 %v970, %v960
    %v972 = vadd.s32 %v971, %v962
    %v973 = vand.u32 %v950, 65535
    %v974 = vshrl.u32 %v950, 16
    %v975 = vand.u32 %v945, 65535
    %v976 = vshrl.u32 %v945, 16
    %v977 = vmul.u32 %v973, %v975
    %v978 = vmul.u32 %v973, %v976
    %v979 = vmul.u32 %v974, %v975
    %v980 = vmul.u32 %v974, %v976
    %v981 = vshll.u32 %v978, 16
    %v982 = vshrl.u32 %v978, 16
    %v983 = vshll.u32 %v979, 16
    %v984 = vshrl.u32 %v979, 16
    %vm985 = vc.u32 %v977, %v981
    %v986 = vsel %vm985, 1, 0
    %v987 = vadd.s32 %v977, %v981
    %v988 = vadd.s32 %v980, %v986
    %vm989 = vc.u32 %v987, %v983
    %v990 = vsel %vm989, 1, 0
    %v991 = vadd.s32 %v987, %v983
    %v992 = vadd.s32 %v988, %v990
    %v993 = vadd.s32 %v992, %v982
    %v994 = vadd.s32 %v993, %v984
    %v995 = vmul.u32 %v950, %v941
    %v996 = vadd.s32 %v972, %v991
    %vm997 = vc.u32 %v972, %v991
    %v998 = vadd.s32 %v994, 1
    %v999 = vsel %vm997, %v998, %v994
    %v1000 = vadd.s32 %v995, %v999
    %v1001 = vadd.s32 %v1000, 536870912
    %v1002 = vshrl.u32 %v1001, 30
    %v1003 = vshll.u32 %v1002, 30
    %v1004 = vsub.s32 %v1000, %v1003
    %vm1005 = vcmp.lt.s32.totalorder %v1004, 0
    %v1006 = vsub.s32 0, %v1004
    %v1007 = vsel %vm1005, %v1006, %v1004
    %v1008 = vclz %v1007
    %v1009 = vsub.s32 %v1008, 2
    %vm1010 = vcmp.gt.s32.totalorder 0, %v1009
    %v1011 = vsel %vm1010, 0, %v1009
    %v1012 = vsub.s32 32, %v1011
    %v1013 = vshll.u32 %v1004, %v1011
    %v1014 = vshrl.u32 %v996, %v1012
    %v1015 = vor.u32 %v1013, %v1014
    %v1016 = vsub.s32 4294967266, %v1011
    %v1017 = vadd.s32 %v1016, 127
    %v1018 = vshll.u32 %v1017, 23
    %v1019 = vor.u32 4788187, %v1018
    %v1020 = vand.u32 2147483647, %v1019
    %v1022 = vcvt.s32.f32 %v1015
    %v1023 = vmul.f32 %v1022, %v1020
    %v1024 = vxor.u32 %v1023, 2147483648
    %v1025 = vsel %vm904, %v1024, %v1023
    %v1026 = vsub.s32 4, %v1002
    %v1027 = vsel %vm904, %v1026, %v1002
    %v1028 = vsel %vm903, %v275, %v1025
    %v1029 = vsel %vm903, 0, %v1027
    %v1030 = vmul.f32 %v1028, %v1028
    %v1031 = vmul.f32 %v1030, -0.001358992
    %v1032 = vadd.f32 %v1031, 0.041655596
    %v1033 = vmul.f32 %v1030, %v1032
    %v1034 = vadd.f32 %v1033, -0.4999988
    %v1035 = vmul.f32 %v1030, %v1034
    %v1036 = vadd.f32 1.0, %v1035
    %v1037 = vmul.f32 %v1028, %v1028
    %v1038 = vmul.f32 %v1037, -0.00019511016
    %v1039 = vadd.f32 %v1038, 0.008332121
    %v1040 = vmul.f32 %v1037, %v1039
    %v1041 = vadd.f32 %v1040, -0.16666654
    %v1042 = vmul.f32 %v1037, %v1041
    %v1043 = vadd.f32 %v1042, 1.0
    %v1044 = vmul.f32 %v1043, %v1028
    %vm1045 = vweird.f32 %v275
    %v1046 = vand.u32 %v1029, 3
    %vm1047 = vcmp.lt.s32.totalorder %v1046, 2
    %vm1048 = vcmp.eq.s32.totalorder %v1046, 0
    %v1049 = vxor.u32 %v1044, 2147483648
    %v1050 = vsel %vm1048, %v1036, %v1049
    %vm1051 = vcmp.eq.s32.totalorder %v1046, 2
    %v1052 = vxor.u32 %v1036, 2147483648
    %v1053 = vsel %vm1051, %v1052, %v1044
    %v1054 = vsel %vm1047, %v1050, %v1053
    %v1055 = vsel %vm1045, nan, %v1054
    %v1056 = vand.u32 2147483647, %v266
    %vm1057 = vcmp.le.f32.partialorder %v1056, 0.7853982
    %vm1058 = vcmp.lt.s32.totalorder %v266, 0
    %v1059 = vand.u32 %v266, 2139095040
    %v1060 = vshrl.u32 %v1059, 23
    %v1061 = vsub.s32 %v1060, 127
    %v1062 = vand.u32 2147483647, %v266
    %v1063 = vand.u32 %v1062, 8388607
    %v1064 = vor.u32 %v1063, 8388608
    %v1065 = vsub.s32 0, %v1064
    %v1066 = vadd.s32 %v1061, 1
    %vm1067 = vcmp.gt.s32.totalorder %v1066, 0
    %v1068 = vsel %vm1067, %v1066, 0
    %v1069 = vshrl.u32 %v1068, 5
    %v1070 = vand.u32 %v1068, 31
    %v1071 = vsub.s32 32, %v1070
    %v1072 = vshrl.u32 683565275, %v1071
    %v1073 = vshll.u32 683565275, %v1070
    %v1074 = vshrl.u32 2475754826, %v1071
    %v1075 = vor.u32 %v1073, %v1074
    %v1076 = vshll.u32 2475754826, %v1070
    %v1077 = vshrl.u32 2131351028, %v1071
    %v1078 = vor.u32 %v1076, %v1077
    %v1079 = vshll.u32 2131351028, %v1070
    %v1080 = vshrl.u32 2102212464, %v1071
    %v1081 = vor.u32 %v1079, %v1080
    %v1082 = vshll.u32 2102212464, %v1070
    %v1083 = vshrl.u32 920167782, %v1071
    %v1084 = vor.u32 %v1082, %v1083
    %v1085 = vshll.u32 920167782, %v1070
    %v1086 = vshrl.u32 1326507024, %v1071
    %v1087 = vor.u32 %v1085, %v1086
    %vm1088 = vcmp.lt.s32.totalorder %v1069, 1
    %vm1089 = vcmp.lt.s32.totalorder %v1069, 2
    %vm1090 = vcmp.lt.s32.totalorder %v1069, 3
    %vm1091 = vcmp.lt.s32.totalorder %v1069, 4
    %v1092 = vsel %vm1088, %v1072, %v1075
    %v1093 = vsel %vm1091, %v1081, 2102212464
    %v1094 = vsel %vm1090, %v1078, %v1093
    %v1095 = vsel %vm1089, %v1092, %v1094
    %v1096 = vsel %vm1088, %v1075, %v1078
    %v1097 = vsel %vm1091, %v1084, 920167782
    %v1098 = vsel %vm1090, %v1081, %v1097
    %v1099 = vsel %vm1089, %v1096, %v1098
    %v1100 = vsel %vm1088, %v1078, %v1081
    %v1101 = vsel %vm1091, %v1087, 1326507024
    %v1102 = vsel %vm1090, %v1084, %v1101
    %v1103 = vsel %vm1089, %v1100, %v1102
    %v1104 = vshll.u32 %v1064, 8
    %v1105 = vand.u32 %v1104, 65535
    %v1106 = vshrl.u32 %v1104, 16
    %v1107 = vand.u32 %v1103, 65535
    %v1108 = vshrl.u32 %v1103, 16
    %v1109 = vmul.u32 %v1105, %v1107
    %v1110 = vmul.u32 %v1105, %v1108
    %v1111 = vmul.u32 %v1106, %v1107
    %v1112 = vmul.u32 %v1106, %v1108
    %v1113 = vshll.u32 %v1110, 16
    %v1114 = vshrl.u32 %v1110, 16
    %v1115 = vshll.u32 %v1111, 16
    %v1116 = vshrl.u32 %v1111, 16
    %vm1117 = vc.u32 %v1109, %v1113
    %v1118 = vsel %vm1117, 1, 0
    %v1119 = vadd.s32 %v1109, %v1113
    %v1120 = vadd.s32 %v1112, %v1118
    %vm1121 = vc.u32 %v1119, %v1115
    %v1122 = vsel %vm1121, 1, 0
    %v1123 = vadd.s32 %v1119, %v1115
    %v1124 = vadd.s32 %v1120, %v1122
    %v1125 = vadd.s32 %v1124, %v1114
    %v1126 = vadd.s32 %v1125, %v1116
    %v1127 = vand.u32 %v1104, 65535
    %v1128 = vshrl.u32 %v1104, 16
    %v1129 = vand.u32 %v1099, 65535
    %v1130 = vshrl.u32 %v1099, 16
    %v1131 = vmul.u32 %v1127, %v1129
    %v1132 = vmul.u32 %v1127, %v1130
    %v1133 = vmul.u32 %v1128, %v1129
    %v1134 = vmul.u32 %v1128, %v1130
    %v1135 = vshll.u32 %v1132, 16
    %v1136 = vshrl.u32 %v1132, 16
    %v1137 = vshll.u32 %v1133, 16
    %v1138 = vshrl.u32 %v1133, 16
    %vm1139 = vc.u32 %v1131, %v1135
    %v1140 = vsel %vm1139, 1, 0
    %v1141 = vadd.s32 %v1131, %v1135
    %v1142 = vadd.s32 %v1134, %v1140
    %vm1143 = vc.u32 %v1141, %v1137
    %v1144 = vsel %vm1143, 1, 0
    %v1145 = vadd.s32 %v1141, %v1137
    %v1146 = vadd.s32 %v1142, %v1144
    %v1147 = vadd.s32 %v1146, %v1136
    %v1148 = vadd.s32 %v1147, %v1138
    %v1149 = vmul.u32 %v1104, %v1095
    %v1150 = vadd.s32 %v1126, %v1145
    %vm1151 = vc.u32 %v1126, %v1145
    %v1152 = vadd.s32 %v1148, 1
    %v1153 = vsel %vm1151, %v1152, %v1148
    %v1154 = vadd.s32 %v1149, %v1153
    %v1155 = vadd.s32 %v1154, 536870912
    %v1156 = vshrl.u32 %v1155, 30
    %v1157 = vshll.u32 %v1156, 30
    %v1158 = vsub.s32 %v1154, %v1157
    %vm1159 = vcmp.lt.s32.totalorder %v1158, 0
    %v1160 = vsub.s32 0, %v1158
    %v1161 = vsel %vm1159, %v1160, %v1158
    %v1162 = vclz %v1161
    %v1163 = vsub.s32 %v1162, 2
    %vm1164 = vcmp.gt.s32.totalorder 0, %v1163
    %v1165 = vsel %vm1164, 0, %v1163
    %v1166 = vsub.s32 32, %v1165
    %v1167 = vshll.u32 %v1158, %v1165
    %v1168 = vshrl.u32 %v1150, %v1166
    %v1169 = vor.u32 %v1167, %v1168
    %v1170 = vsub.s32 4294967266, %v1165
    %v1171 = vadd.s32 %v1170, 127
    %v1172 = vshll.u32 %v1171, 23
    %v1173 = vor.u32 4788187, %v1172
    %v1174 = vand.u32 2147483647, %v1173
    %v1176 = vcvt.s32.f32 %v1169
    %v1177 = vmul.f32 %v1176, %v1174
    %v1178 = vxor.u32 %v1177, 2147483648
    %v1179 = vsel %vm1058, %v1178, %v1177
    %v1180 = vsub.s32 4, %v1156
    %v1181 = vsel %vm1058, %v1180, %v1156
    %v1182 = vsel %vm1057, %v266, %v1179
    %v1183 = vsel %vm1057, 0, %v1181
    %v1184 = vmul.f32 %v1182, %v1182
    %v1185 = vmul.f32 %v1184, -0.001358992
    %v1186 = vadd.f32 %v1185, 0.041655596
    %v1187 = vmul.f32 %v1184, %v1186
    %v1188 = vadd.f32 %v1187, -0.4999988
    %v1189 = vmul.f32 %v1184, %v1188
    %v1190 = vadd.f32 1.0, %v1189
    %v1191 = vmul.f32 %v1182, %v1182
    %v1192 = vmul.f32 %v1191, -0.00019511016
    %v1193 = vadd.f32 %v1192, 0.008332121
    %v1194 = vmul.f32 %v1191, %v1193
    %v1195 = vadd.f32 %v1194, -0.16666654
    %v1196 = vmul.f32 %v1191, %v1195
    %v1197 = vadd.f32 %v1196, 1.0
    %v1198 = vmul.f32 %v1197, %v1182
    %vm1199 = vweird.f32 %v266
    %v1200 = vand.u32 %v1183, 3
    %vm1201 = vcmp.lt.s32.totalorder %v1200, 2
    %vm1202 = vcmp.eq.s32.totalorder %v1200, 0
    %v1203 = vxor.u32 %v1198, 2147483648
    %v1204 = vsel %vm1202, %v1190, %v1203
    %vm1205 = vcmp.eq.s32.totalorder %v1200, 2
    %v1206 = vxor.u32 %v1190, 2147483648
    %v1207 = vsel %vm1205, %v1206, %v1198
    %v1208 = vsel %vm1201, %v1204, %v1207
    %v1209 = vsel %vm1199, nan, %v1208
    %v1210 = vand.u32 2147483647, %v276
    %vm1211 = vcmp.le.f32.partialorder %v1210, 0.7853982
    %vm1212 = vcmp.lt.s32.totalorder %v276, 0
    %v1213 = vand.u32 %v276, 2139095040
    %v1214 = vshrl.u32 %v1213, 23
    %v1215 = vsub.s32 %v1214, 127
    %v1216 = vand.u32 2147483647, %v276
    %v1217 = vand.u32 %v1216, 8388607
    %v1218 = vor.u32 %v1217, 8388608
    %v1219 = vsub.s32 0, %v1218
    %v1220 = vadd.s32 %v1215, 1
    %vm1221 = vcmp.gt.s32.totalorder %v1220, 0
    %v1222 = vsel %vm1221, %v1220, 0
    %v1223 = vshrl.u32 %v1222, 5
    %v1224 = vand.u32 %v1222, 31
    %v1225 = vsub.s32 32, %v1224
    %v1226 = vshrl.u32 683565275, %v1225
    %v1227 = vshll.u32 683565275, %v1224
    %v1228 = vshrl.u32 2475754826, %v1225
    %v1229 = vor.u32 %v1227, %v1228
    %v1230 = vshll.u32 2475754826, %v1224
    %v1231 = vshrl.u32 2131351028, %v1225
    %v1232 = vor.u32 %v1230, %v1231
    %v1233 = vshll.u32 2131351028, %v1224
    %v1234 = vshrl.u32 2102212464, %v1225
    %v1235 = vor.u32 %v1233, %v1234
    %v1236 = vshll.u32 2102212464, %v1224
    %v1237 = vshrl.u32 920167782, %v1225
    %v1238 = vor.u32 %v1236, %v1237
    %v1239 = vshll.u32 920167782, %v1224
    %v1240 = vshrl.u32 1326507024, %v1225
    %v1241 = vor.u32 %v1239, %v1240
    %vm1242 = vcmp.lt.s32.totalorder %v1223, 1
    %vm1243 = vcmp.lt.s32.totalorder %v1223, 2
    %vm1244 = vcmp.lt.s32.totalorder %v1223, 3
    %vm1245 = vcmp.lt.s32.totalorder %v1223, 4
    %v1246 = vsel %vm1242, %v1226, %v1229
    %v1247 = vsel %vm1245, %v1235, 2102212464
    %v1248 = vsel %vm1244, %v1232, %v1247
    %v1249 = vsel %vm1243, %v1246, %v1248
    %v1250 = vsel %vm1242, %v1229, %v1232
    %v1251 = vsel %vm1245, %v1238, 920167782
    %v1252 = vsel %vm1244, %v1235, %v1251
    %v1253 = vsel %vm1243, %v1250, %v1252
    %v1254 = vsel %vm1242, %v1232, %v1235
    %v1255 = vsel %vm1245, %v1241, 1326507024
    %v1256 = vsel %vm1244, %v1238, %v1255
    %v1257 = vsel %vm1243, %v1254, %v1256
    %v1258 = vshll.u32 %v1218, 8
    %v1259 = vand.u32 %v1258, 65535
    %v1260 = vshrl.u32 %v1258, 16
    %v1261 = vand.u32 %v1257, 65535
    %v1262 = vshrl.u32 %v1257, 16
    %v1263 = vmul.u32 %v1259, %v1261
    %v1264 = vmul.u32 %v1259, %v1262
    %v1265 = vmul.u32 %v1260, %v1261
    %v1266 = vmul.u32 %v1260, %v1262
    %v1267 = vshll.u32 %v1264, 16
    %v1268 = vshrl.u32 %v1264, 16
    %v1269 = vshll.u32 %v1265, 16
    %v1270 = vshrl.u32 %v1265, 16
    %vm1271 = vc.u32 %v1263, %v1267
    %v1272 = vsel %vm1271, 1, 0
    %v1273 = vadd.s32 %v1263, %v1267
    %v1274 = vadd.s32 %v1266, %v1272
    %vm1275 = vc.u32 %v1273, %v1269
    %v1276 = vsel %vm1275, 1, 0
    %v1277 = vadd.s32 %v1273, %v1269
    %v1278 = vadd.s32 %v1274, %v1276
    %v1279 = vadd.s32 %v1278, %v1268
    %v1280 = vadd.s32 %v1279, %v1270
    %v1281 = vand.u32 %v1258, 65535
    %v1282 = vshrl.u32 %v1258, 16
    %v1283 = vand.u32 %v1253, 65535
    %v1284 = vshrl.u32 %v1253, 16
    %v1285 = vmul.u32 %v1281, %v1283
    %v1286 = vmul.u32 %v1281, %v1284
    %v1287 = vmul.u32 %v1282, %v1283
    %v1288 = vmul.u32 %v1282, %v1284
    %v1289 = vshll.u32 %v1286, 16
    %v1290 = vshrl.u32 %v1286, 16
    %v1291 = vshll.u32 %v1287, 16
    %v1292 = vshrl.u32 %v1287, 16
    %vm1293 = vc.u32 %v1285, %v1289
    %v1294 = vsel %vm1293, 1, 0
    %v1295 = vadd.s32 %v1285, %v1289
    %v1296 = vadd.s32 %v1288, %v1294
    %vm1297 = vc.u32 %v1295, %v1291
    %v1298 = vsel %vm1297, 1, 0
    %v1299 = vadd.s32 %v1295, %v1291
    %v1300 = vadd.s32 %v1296, %v1298
    %v1301 = vadd.s32 %v1300, %v1290
    %v1302 = vadd.s32 %v1301, %v1292
    %v1303 = vmul.u32 %v1258, %v1249
    %v1304 = vadd.s32 %v1280, %v1299
    %vm1305 = vc.u32 %v1280, %v1299
    %v1306 = vadd.s32 %v1302, 1
    %v1307 = vsel %vm1305, %v1306, %v1302
    %v1308 = vadd.s32 %v1303, %v1307
    %v1309 = vadd.s32 %v1308, 536870912
    %v1310 = vshrl.u32 %v1309, 30
    %v1311 = vshll.u32 %v1310, 30
    %v1312 = vsub.s32 %v1308, %v1311
    %vm1313 = vcmp.lt.s32.totalorder %v1312, 0
    %v1314 = vsub.s32 0, %v1312
    %v1315 = vsel %vm1313, %v1314, %v1312
    %v1316 = vclz %v1315
    %v1317 = vsub.s32 %v1316, 2
    %vm1318 = vcmp.gt.s32.totalorder 0, %v1317
    %v1319 = vsel %vm1318, 0, %v1317
    %v1320 = vsub.s32 32, %v1319
    %v1321 = vshll.u32 %v1312, %v1319
    %v1322 = vshrl.u32 %v1304, %v1320
    %v1323 = vor.u32 %v1321, %v1322
    %v1324 = vsub.s32 4294967266, %v1319
    %v1325 = vadd.s32 %v1324, 127
    %v1326 = vshll.u32 %v1325, 23
    %v1327 = vor.u32 4788187, %v1326
    %v1328 = vand.u32 2147483647, %v1327
    %v1330 = vcvt.s32.f32 %v1323
    %v1331 = vmul.f32 %v1330, %v1328
    %v1332 = vxor.u32 %v1331, 2147483648
    %v1333 = vsel %vm1212, %v1332, %v1331
    %v1334 = vsub.s32 4, %v1310
    %v1335 = vsel %vm1212, %v1334, %v1310
    %v1336 = vsel %vm1211, %v276, %v1333
    %v1337 = vsel %vm1211, 0, %v1335
    %v1338 = vmul.f32 %v1336, %v1336
    %v1339 = vmul.f32 %v1338, -0.001358992
    %v1340 = vadd.f32 %v1339, 0.041655596
    %v1341 = vmul.f32 %v1338, %v1340
    %v1342 = vadd.f32 %v1341, -0.4999988
    %v1343 = vmul.f32 %v1338, %v1342
    %v1344 = vadd.f32 1.0, %v1343
    %v1345 = vmul.f32 %v1336, %v1336
    %v1346 = vmul.f32 %v1345, -0.00019511016
    %v1347 = vadd.f32 %v1346, 0.008332121
    %v1348 = vmul.f32 %v1345, %v1347
    %v1349 = vadd.f32 %v1348, -0.16666654
    %v1350 = vmul.f32 %v1345, %v1349
    %v1351 = vadd.f32 %v1350, 1.0
    %v1352 = vmul.f32 %v1351, %v1336
    %vm1353 = vweird.f32 %v276
    %v1354 = vand.u32 %v1337, 3
    %vm1355 = vcmp.lt.s32.totalorder %v1354, 2
    %vm1356 = vcmp.eq.s32.totalorder %v1354, 0
    %v1357 = vxor.u32 %v1352, 2147483648
    %v1358 = vsel %vm1356, %v1344, %v1357
    %vm1359 = vcmp.eq.s32.totalorder %v1354, 2
    %v1360 = vxor.u32 %v1344, 2147483648
    %v1361 = vsel %vm1359, %v1360, %v1352
    %v1362 = vsel %vm1355, %v1358, %v1361
    %v1363 = vsel %vm1353, nan, %v1362
    %v1364 = vand.u32 2147483647, %v268
    %vm1365 = vcmp.le.f32.partialorder %v1364, 0.7853982
    %vm1366 = vcmp.lt.s32.totalorder %v268, 0
    %v1367 = vand.u32 %v268, 2139095040
    %v1368 = vshrl.u32 %v1367, 23
    %v1369 = vsub.s32 %v1368, 127
    %v1370 = vand.u32 2147483647, %v268
    %v1371 = vand.u32 %v1370, 8388607
    %v1372 = vor.u32 %v1371, 8388608
    %v1373 = vsub.s32 0, %v1372
    %v1374 = vadd.s32 %v1369, 1
    %vm1375 = vcmp.gt.s32.totalorder %v1374, 0
    %v1376 = vsel %vm1375, %v1374, 0
    %v1377 = vshrl.u32 %v1376, 5
    %v1378 = vand.u32 %v1376, 31
    %v1379 = vsub.s32 32, %v1378
    %v1380 = vshrl.u32 683565275, %v1379
    %v1381 = vshll.u32 683565275, %v1378
    %v1382 = vshrl.u32 2475754826, %v1379
    %v1383 = vor.u32 %v1381, %v1382
    %v1384 = vshll.u32 2475754826, %v1378
    %v1385 = vshrl.u32 2131351028, %v1379
    %v1386 = vor.u32 %v1384, %v1385
    %v1387 = vshll.u32 2131351028, %v1378
    %v1388 = vshrl.u32 2102212464, %v1379
    %v1389 = vor.u32 %v1387, %v1388
    %v1390 = vshll.u32 2102212464, %v1378
    %v1391 = vshrl.u32 920167782, %v1379
    %v1392 = vor.u32 %v1390, %v1391
    %v1393 = vshll.u32 920167782, %v1378
    %v1394 = vshrl.u32 1326507024, %v1379
    %v1395 = vor.u32 %v1393, %v1394
    %vm1396 = vcmp.lt.s32.totalorder %v1377, 1
    %vm1397 = vcmp.lt.s32.totalorder %v1377, 2
    %vm1398 = vcmp.lt.s32.totalorder %v1377, 3
    %vm1399 = vcmp.lt.s32.totalorder %v1377, 4
    %v1400 = vsel %vm1396, %v1380, %v1383
    %v1401 = vsel %vm1399, %v1389, 2102212464
    %v1402 = vsel %vm1398, %v1386, %v1401
    %v1403 = vsel %vm1397, %v1400, %v1402
    %v1404 = vsel %vm1396, %v1383, %v1386
    %v1405 = vsel %vm1399, %v1392, 920167782
    %v1406 = vsel %vm1398, %v1389, %v1405
    %v1407 = vsel %vm1397, %v1404, %v1406
    %v1408 = vsel %vm1396, %v1386, %v1389
    %v1409 = vsel %vm1399, %v1395, 1326507024
    %v1410 = vsel %vm1398, %v1392, %v1409
    %v1411 = vsel %vm1397, %v1408, %v1410
    %v1412 = vshll.u32 %v1372, 8
    %v1413 = vand.u32 %v1412, 65535
    %v1414 = vshrl.u32 %v1412, 16
    %v1415 = vand.u32 %v1411, 65535
    %v1416 = vshrl.u32 %v1411, 16
    %v1417 = vmul.u32 %v1413, %v1415
    %v1418 = vmul.u32 %v1413, %v1416
    %v1419 = vmul.u32 %v1414, %v1415
    %v1420 = vmul.u32 %v1414, %v1416
    %v1421 = vshll.u32 %v1418, 16
    %v1422 = vshrl.u32 %v1418, 16
    %v1423 = vshll.u32 %v1419, 16
    %v1424 = vshrl.u32 %v1419, 16
    %vm1425 = vc.u32 %v1417, %v1421
    %v1426 = vsel %vm1425, 1, 0
    %v1427 = vadd.s32 %v1417, %v1421
    %v1428 = vadd.s32 %v1420, %v1426
    %vm1429 = vc.u32 %v1427, %v1423
    %v1430 = vsel %vm1429, 1, 0
    %v1431 = vadd.s32 %v1427, %v1423
    %v1432 = vadd.s32 %v1428, %v1430
    %v1433 = vadd.s32 %v1432, %v1422
    %v1434 = vadd.s32 %v1433, %v1424
    %v1435 = vand.u32 %v1412, 65535
    %v1436 = vshrl.u32 %v1412, 16
    %v1437 = vand.u32 %v1407, 65535
    %v1438 = vshrl.u32 %v1407, 16
    %v1439 = vmul.u32 %v1435, %v1437
    %v1440 = vmul.u32 %v1435, %v1438
    %v1441 = vmul.u32 %v1436, %v1437
    %v1442 = vmul.u32 %v1436, %v1438
    %v1443 = vshll.u32 %v1440, 16
    %v1444 = vshrl.u32 %v1440, 16
    %v1445 = vshll.u32 %v1441, 16
    %v1446 = vshrl.u32 %v1441, 16
    %vm1447 = vc.u32 %v1439, %v1443
    %v1448 = vsel %vm1447, 1, 0
    %v1449 = vadd.s32 %v1439, %v1443
    %v1450 = vadd.s32 %v1442, %v1448
    %vm1451 = vc.u32 %v1449, %v1445
    %v1452 = vsel %vm1451, 1, 0
    %v1453 = vadd.s32 %v1449, %v1445
    %v1454 = vadd.s32 %v1450, %v1452
    %v1455 = vadd.s32 %v1454, %v1444
    %v1456 = vadd.s32 %v1455, %v1446
    %v1457 = vmul.u32 %v1412, %v1403
    %v1458 = vadd.s32 %v1434, %v1453
    %vm1459 = vc.u32 %v1434, %v1453
    %v1460 = vadd.s32 %v1456, 1
    %v1461 = vsel %vm1459, %v1460, %v1456
    %v1462 = vadd.s32 %v1457, %v1461
    %v1463 = vadd.s32 %v1462, 536870912
    %v1464 = vshrl.u32 %v1463, 30
    %v1465 = vshll.u32 %v1464, 30
    %v1466 = vsub.s32 %v1462, %v1465
    %vm1467 = vcmp.lt.s32.totalorder %v1466, 0
    %v1468 = vsub.s32 0, %v1466
    %v1469 = vsel %vm1467, %v1468, %v1466
    %v1470 = vclz %v1469
    %v1471 = vsub.s32 %v1470, 2
    %vm1472 = vcmp.gt.s32.totalorder 0, %v1471
    %v1473 = vsel %vm1472, 0, %v1471
    %v1474 = vsub.s32 32, %v1473
    %v1475 = vshll.u32 %v1466, %v1473
    %v1476 = vshrl.u32 %v1458, %v1474
    %v1477 = vor.u32 %v1475, %v1476
    %v1478 = vsub.s32 4294967266, %v1473
    %v1479 = vadd.s32 %v1478, 127
    %v1480 = vshll.u32 %v1479, 23
    %v1481 = vor.u32 4788187, %v1480
    %v1482 = vand.u32 2147483647, %v1481
    %v1484 = vcvt.s32.f32 %v1477
    %v1485 = vmul.f32 %v1484, %v1482
    %v1486 = vxor.u32 %v1485, 2147483648
    %v1487 = vsel %vm1366, %v1486, %v1485
    %v1488 = vsub.s32 4, %v1464
    %v1489 = vsel %vm1366, %v1488, %v1464
    %v1490 = vsel %vm1365, %v268, %v1487
    %v1491 = vsel %vm1365, 0, %v1489
    %v1492 = vmul.f32 %v1490, %v1490
    %v1493 = vmul.f32 %v1492, -0.001358992
    %v1494 = vadd.f32 %v1493, 0.041655596
    %v1495 = vmul.f32 %v1492, %v1494
    %v1496 = vadd.f32 %v1495, -0.4999988
    %v1497 = vmul.f32 %v1492, %v1496
    %v1498 = vadd.f32 1.0, %v1497
    %v1499 = vmul.f32 %v1490, %v1490
    %v1500 = vmul.f32 %v1499, -0.00019511016
    %v1501 = vadd.f32 %v1500, 0.008332121
    %v1502 = vmul.f32 %v1499, %v1501
    %v1503 = vadd.f32 %v1502, -0.16666654
    %v1504 = vmul.f32 %v1499, %v1503
    %v1505 = vadd.f32 %v1504, 1.0
    %v1506 = vmul.f32 %v1505, %v1490
    %vm1507 = vweird.f32 %v268
    %v1508 = vand.u32 %v1491, 3
    %vm1509 = vcmp.lt.s32.totalorder %v1508, 2
    %vm1510 = vcmp.eq.s32.totalorder %v1508, 0
    %v1511 = vxor.u32 %v1506, 2147483648
    %v1512 = vsel %vm1510, %v1498, %v1511
    %vm1513 = vcmp.eq.s32.totalorder %v1508, 2
    %v1514 = vxor.u32 %v1498, 2147483648
    %v1515 = vsel %vm1513, %v1514, %v1506
    %v1516 = vsel %vm1509, %v1512, %v1515
    %v1517 = vsel %vm1507, nan, %v1516
    %1522 = vrot.lane.b32.xlu0 %v1055, 52
    %v1523 = vpop.permute.xlu0 %1522
    %1524 = vrot.lane.b32.xlu0 %v1209, 52
    %v1525 = vpop.permute.xlu0 %1524
    %1526 = vrot.lane.b32.xlu0 %v1363, 52
    %v1527 = vpop.permute.xlu0 %1526
    %1528 = vrot.lane.b32.xlu0 %v1517, 52
    %v1529 = vpop.permute.xlu0 %1528
    %v1530 = vsel %vm898, %v1523, %v1525
    %v1531 = vsel %vm898, %v1527, %v1529
    %vm1536 = vcmask 1047968
    %1537 = vst.msk [vmem:[#allocation2 + $0x8] sm:$0xff] %vm1536, %v1523
    %vm1538 = vcmask 850944
    %1539 = vst.msk [vmem:[#allocation2 + $0x10] sm:$0xff] %vm1538, %v1530
    %1540 = vst.msk [vmem:[#allocation2 + $0x20] sm:$0xff] %vm1536, %v1527
    %1541 = vst.msk [vmem:[#allocation2 + $0x28] sm:$0xff] %vm1538, %v1531
    // Predicated region
    $region10: #{tpu_custom_call.1} parent=1 // pred_check
      _
    $region11: #{tpu_custom_call.1} parent=1 // pred_check_branch
      %1543 = sbr.rel (0) target = $region13
    $region12: #{tpu_custom_call.1} parent=1 // pred_region
      %1545 = vsyncadd [#allocation3], 0
      %s1546 = sshll.u32 [#allocation2], 4
      %s1547 = int_to_ptr.vmem [resolvable:$true] %s1546
      %s1548 = sshll.u32 %s2, 4
      %s1549 = int_to_ptr.hbm [resolvable:$true] %s1548
      %1554 = dma.vmem_to_hbm [thread:$0]  %s1547, 768, %s1549, [#allocation3], 384, 384, 24
    $region13: #{tpu_custom_call.1} parent=1 // pred_fallthru
      _
    // Predicated region
    $region14: #{tpu_custom_call.1} parent=1 // pred_check
      _
    $region15: #{tpu_custom_call.1} parent=1 // pred_check_branch
      %1556 = sbr.rel (0) target = $region17
    $region16: #{tpu_custom_call.1} parent=1 // pred_region
      %1558 = dma.done [#allocation3], 768
    $region17: #{tpu_custom_call.1} parent=1 // pred_fallthru
      _
    %1559 = vsyncpa [#allocation3], 1

</llo_original>
